<compile_context>
chip_gen: v7x
topology: tpu7x:2x2x1
jax: 0.10.0
libtpu: 0.0.40
codegen_flags: <defaults>
</compile_context>

<pallas_src>
import functools

import jax
import jax.numpy as jnp
from jax import lax
from jax.experimental import pallas as pl
from jax.experimental.pallas import tpu as pltpu


# ---------------------------------------------------------------------------
# Kernels
# ---------------------------------------------------------------------------
def router_kernel(x_ref, wr_ref, br_ref, w_ref, idx_ref):
    """Top-1 router: max softmax prob + argmax expert index (float32)."""
    n_experts = wr_ref.shape[-1]
    logits = jnp.dot(x_ref[...], wr_ref[...],
                     preferred_element_type=jnp.float32)
    logits = logits + br_ref[...]                                   # (tm, E)
    m = jnp.max(logits, axis=-1, keepdims=True)
    denom = jnp.sum(jnp.exp(logits - m), axis=-1, keepdims=True)
    # max softmax prob == exp(0) / denom  (argmax(probs) == argmax(logits)).
    w_ref[...] = 1.0 / denom
    eiota = lax.broadcasted_iota(jnp.int32, logits.shape, 1)
    # First index achieving the max (matches torch.max tie-breaking).
    idx_ref[...] = jnp.min(jnp.where(logits == m, eiota, n_experts),
                           axis=-1, keepdims=True)


def dispatch_kernel(hits_ref, x_ref, we_ref, be_ref, w_ref, idx_ref, o_ref,
                    acc_ref=None, *, n_experts):
    """One expert step: gated (tm,D)x(D,D) GEMM + masked select + combine."""
    i = pl.program_id(0)
    e = pl.program_id(1)
    acc = o_ref if acc_ref is None else acc_ref   # accumulate in place if f32

    @pl.when(e == 0)
    def _init():
        acc[...] = jnp.zeros_like(acc)

    # Skip experts with no routed token in this row tile (hit flags are
    # scalar-prefetched into SMEM).  The weight DMA still streams (BlockSpec),
    # only the MXU/VPU work is saved — a win whenever the step is MXU-bound.
    @pl.when(hits_ref[i * n_experts + e] > 0)
    def _expert():
        y = jnp.dot(x_ref[...], we_ref[0], preferred_element_type=jnp.float32)
        y = y + be_ref[0]                                           # (tm, D)
        acc[...] = jnp.where(idx_ref[...] == e, y, acc[...])

    @pl.when(e == n_experts - 1)
    def _combine():
        o_ref[...] = (acc[...] * w_ref[...]).astype(o_ref.dtype)


# ---------------------------------------------------------------------------
# Tiling / VMEM helpers
# ---------------------------------------------------------------------------
def _vmem_budget_bytes():
    cap = 64 << 20                      # conservative fallback (v7x-sized)
    try:
        cap = int(getattr(pltpu.get_tpu_info(), "vmem_capacity_bytes", cap))
    except Exception:
        pass
    # ~85% of physical VMEM, capped: ~109 MiB on 128-MiB parts, ~54 MiB on v7x.
    return min(int(cap * 0.85), 112 << 20)


def _dispatch_resident_bytes(tm, d_model, x_isz, w_isz, out_isz, needs_acc):
    lane = 128
    b = 2 * tm * d_model * x_isz        # x tile (double buffered)
    b += 2 * d_model * d_model * w_isz  # we[e] (double buffered)
    b += 2 * 8 * d_model * 4            # be[e] (sublane padded)
    b += 2 * 2 * tm * lane * 4          # w / idx tiles (lane padded)
    b += 2 * tm * d_model * out_isz     # output tile
    if needs_acc:
        b += tm * d_model * 4           # f32 accumulator scratch
    b += 3 * tm * d_model * 4           # Mosaic temporaries (f32 dot + chain)
    return b


def _pick_tm(n_tokens, d_model, x_isz, w_isz, out_isz, needs_acc, budget):
    cands = sorted({t for t in range(8, min(1024, n_tokens) + 1, 8)
                    if n_tokens % t == 0}, reverse=True)
    if not cands:
        return n_tokens                 # tiny / odd N: single full-size tile
    # Prefer >= 2 row tiles so both v7x TensorCores get work on the
    # "parallel" row axis (no effect on 1-TC v5e/v6e).
    pref = [t for t in cands if n_tokens // t >= 2] or cands
    for t in pref:
        if _dispatch_resident_bytes(t, d_model, x_isz, w_isz, out_isz,
                                    needs_acc) <= budget:
            return t
    return pref[-1]


# ---------------------------------------------------------------------------
# Wrapper
# ---------------------------------------------------------------------------
def top1_moe(x, wr, br, we, be, *, tm=None, compute_dtype=jnp.bfloat16):
    """Top-1 MoE forward.

    x:  (B, T, D)  activations
    wr: (D, E)     router weight   (transposed vs torch Linear's (E, D))
    br: (1, E)     router bias
    we: (E, D, D)  expert weights  (each transposed vs torch Linear)
    be: (E, D)     expert biases

    compute_dtype: dtype of the expert-GEMM operands (default bf16,
    MXU-native).  Router, accumulation, softmax and combine are always f32;
    output dtype matches x.
    """
    B, T, D = x.shape
    E = wr.shape[-1]
    N = B * T

    cd = jnp.dtype(compute_dtype)
    x_isz = cd.itemsize
    w_isz = cd.itemsize
    out_isz = jnp.dtype(x.dtype).itemsize
    needs_acc = jnp.dtype(x.dtype) != jnp.float32

    budget = _vmem_budget_bytes()
    if tm is None:
        tm = _pick_tm(N, D, x_isz, w_isz, out_isz, needs_acc, budget)
    assert N % tm == 0, "token count must be divisible by the row tile"
    rows = N // tm

    # ---- 1) Router pallas_call (always float32 for routing fidelity) -------
    xf32 = x.reshape(N, D).astype(jnp.float32)
    wr_f = wr.astype(jnp.float32)
    br_f = br.astype(jnp.float32).reshape(1, E)

    r_resident = (2 * tm * D * 4 + 2 * (D * E + 8 * E) * 4
                  + 2 * 2 * tm * 128 * 4 + 4 * tm * max(E, 128) * 4)
    r_limit = int(min(budget, max(2 * r_resident, 32 << 20)))
    r_cost = pl.CostEstimate(
        flops=2 * N * D * E, transcendentals=N * E,
        bytes_accessed=N * D * 4 + D * E * 4 + E * 4 + 2 * N * 4)

    w, idx = pl.pallas_call(
        router_kernel,
        out_shape=(jax.ShapeDtypeStruct((N, 1), jnp.float32),
                   jax.ShapeDtypeStruct((N, 1), jnp.int32)),
        grid=(rows,),
        in_specs=[
            pl.BlockSpec((tm, D), lambda i: (i, 0)),
            pl.BlockSpec((D, E), lambda i: (0, 0)),
            pl.BlockSpec((1, E), lambda i: (0, 0)),
        ],
        out_specs=(pl.BlockSpec((tm, 1), lambda i: (i, 0)),
                   pl.BlockSpec((tm, 1), lambda i: (i, 0))),
        compiler_params=pltpu.CompilerParams(
            dimension_semantics=("parallel",), vmem_limit_bytes=r_limit),
        cost_estimate=r_cost,
    )(xf32, wr_f, br_f)

    # ---- scheduling metadata: per-(row tile, expert) hit flags -------------
    hits = (idx.reshape(rows, tm)[:, :, None]
            == jnp.arange(E, dtype=jnp.int32)[None, None, :])
    hits = hits.any(axis=1).astype(jnp.int32).reshape(rows * E)

    # ---- 2) Expert dispatch pallas_call -------------------------------------
    x_c = x.reshape(N, D).astype(cd)
    we_c = we.astype(cd)
    be_f = be.astype(jnp.float32).reshape(E, 1, D)

    resident = _dispatch_resident_bytes(tm, D, x_isz, w_isz, out_isz, needs_acc)
    vmem_limit = int(min(budget, max(2 * resident, 32 << 20)))
    cost = pl.CostEstimate(
        flops=2 * N * D * D * E,
        transcendentals=0,
        bytes_accessed=(N * D * (x_isz + out_isz) + 2 * N * 4 + rows * E * 4
                        + rows * E * (D * D * w_isz + D * 4)),   # we re-streamed per row tile
    )
    scratch = [pltpu.VMEM((tm, D), jnp.float32)] if needs_acc else []

    grid_spec = pltpu.PrefetchScalarGridSpec(
        num_scalar_prefetch=1,
        grid=(rows, E),
        in_specs=[
            pl.BlockSpec((tm, D), lambda i, e, h: (i, 0)),        # x rows
            pl.BlockSpec((1, D, D), lambda i, e, h: (e, 0, 0)),   # we[e]
            pl.BlockSpec((1, 1, D), lambda i, e, h: (e, 0, 0)),   # be[e]
            pl.BlockSpec((tm, 1), lambda i, e, h: (i, 0)),        # top-1 weight
            pl.BlockSpec((tm, 1), lambda i, e, h: (i, 0)),        # top-1 index
        ],
        out_specs=pl.BlockSpec((tm, D), lambda i, e, h: (i, 0)),
        scratch_shapes=scratch,
    )
    out = pl.pallas_call(
        functools.partial(dispatch_kernel, n_experts=E),
        out_shape=jax.ShapeDtypeStruct((N, D), x.dtype),
        grid_spec=grid_spec,
        compiler_params=pltpu.CompilerParams(
            dimension_semantics=("parallel", "arbitrary"),
            vmem_limit_bytes=vmem_limit),
        cost_estimate=cost,
    )(hits, x_c, we_c, be_f, w, idx)
    return out.reshape(B, T, D)


# ---------------------------------------------------------------------------
# Pure-JAX reference (f32 router; expert GEMMs in expert_dtype)
# ---------------------------------------------------------------------------
def reference_moe(x, wr, br, we, be, expert_dtype=jnp.float32):
    f32 = jnp.float32
    logits = jnp.einsum("btd,de->bte", x.astype(f32), wr.astype(f32),
                        precision=lax.Precision.HIGHEST) + br[0].astype(f32)
    probs = jax.nn.softmax(logits, axis=-1)
    w = jnp.max(probs, axis=-1)
    idx = jnp.argmax(probs, axis=-1)
    ys = jnp.einsum("btd,edf->btef", x.astype(expert_dtype),
                    we.astype(expert_dtype),
                    preferred_element_type=f32,
                    precision=lax.Precision.HIGHEST)
    ys = ys + be[None, None].astype(f32)
    y = jnp.take_along_axis(ys, idx[..., None, None], axis=2)[:, :, 0]
    return (y * w[..., None]).astype(x.dtype)


if __name__ == "__main__":
    # Config: batch_size=2, n_ctx=8, d_model=32, n_experts=4, k=1
    B, T, D, E = 2, 8, 32, 4

    key = jax.random.PRNGKey(0)
    kx, kwr, kbr, kwe, kbe = jax.random.split(key, 5)

    bound = 1.0 / (D ** 0.5)            # torch.nn.Linear default init scale
    x = jax.random.normal(kx, (B, T, D), dtype=jnp.float32)
    # Weights are in (in, out) layout == W^T of torch Linear's (out, in).
    wr = jax.random.uniform(kwr, (D, E), jnp.float32, -bound, bound)
    br = jax.random.uniform(kbr, (1, E), jnp.float32, -bound, bound)
    we = jax.random.uniform(kwe, (E, D, D), jnp.float32, -bound, bound)
    be = jax.random.uniform(kbe, (E, D), jnp.float32, -bound, bound)

    # Default path: bf16 expert GEMMs (MXU-native), f32 router/accum/combine.
    out = jax.block_until_ready(top1_moe(x, wr, br, we, be))
    ref_bf16 = reference_moe(x, wr, br, we, be, expert_dtype=jnp.bfloat16)
    assert out.shape == x.shape
    assert bool(jnp.all(jnp.isfinite(out)))
    assert jnp.allclose(out, ref_bf16, atol=1e-2, rtol=1e-2), "bf16 path mismatch"

    # Opt-in f32 fidelity mode: numerically faithful to the PyTorch module.
    out_f32 = jax.block_until_ready(
        top1_moe(x, wr, br, we, be, compute_dtype=jnp.float32))
    ref_f32 = reference_moe(x, wr, br, we, be, expert_dtype=jnp.float32)
    assert jnp.allclose(out_f32, ref_f32, atol=1e-2, rtol=1e-2), "f32 path mismatch"

    print("KERNEL_OK")
</pallas_src>

<mosaic_0001>
module attributes {stable_mosaic.version = 11 : i64} {
  func.func @router_kernel(%arg0: i32, %arg1: memref<8x32xf32, #tpu.memory_space<vmem>>, %arg2: memref<32x4xf32, #tpu.memory_space<vmem>>, %arg3: memref<1x4xf32, #tpu.memory_space<vmem>>, %arg4: memref<8x1xf32, #tpu.memory_space<vmem>>, %arg5: memref<8x1xi32, #tpu.memory_space<vmem>>) attributes {dimension_semantics = [#tpu.dimension_semantics<parallel>], iteration_bounds = array<i64: 2>, scalar_prefetch = 0 : i64, scratch_operands = 0 : i64, tpu.core_type = #tpu.core_type<tc>, window_params = [{transform_indices = @transform_0, window_bounds = array<i64: 8, 32>}, {pipeline_mode = #tpu.pipeline_mode<synchronous>, transform_indices = @transform_1, window_bounds = array<i64: 32, 4>}, {pipeline_mode = #tpu.pipeline_mode<synchronous>, transform_indices = @transform_2, window_bounds = array<i64: 1, 4>}, {transform_indices = @transform_3, window_bounds = array<i64: 8, 1>}, {transform_indices = @transform_4, window_bounds = array<i64: 8, 1>}]} {
    %c0 = arith.constant 0 : index
    %c0_0 = arith.constant 0 : index
    %0 = vector.load %arg1[%c0, %c0_0] : memref<8x32xf32, #tpu.memory_space<vmem>>, vector<8x32xf32>
    %c0_1 = arith.constant 0 : index
    %c0_2 = arith.constant 0 : index
    %1 = vector.load %arg2[%c0_1, %c0_2] : memref<32x4xf32, #tpu.memory_space<vmem>>, vector<32x4xf32>
    %cst = arith.constant dense<0.000000e+00> : vector<8x4xf32>
    %2 = tpu.matmul %0, %1, %cst {dimension_numbers = #tpu.dot_dimension_numbers<[1], [0], [0], [1], [0, 0, 1, 1], [], []>} : vector<8x32xf32>, vector<32x4xf32>, vector<8x4xf32> -> vector<8x4xf32>
    %c0_3 = arith.constant 0 : index
    %c0_4 = arith.constant 0 : index
    %3 = vector.load %arg3[%c0_3, %c0_4] : memref<1x4xf32, #tpu.memory_space<vmem>>, vector<1x4xf32>
    %4 = vector.broadcast %3 : vector<1x4xf32> to vector<8x4xf32>
    %5 = arith.addf %2, %4 : vector<8x4xf32>
    %cst_5 = arith.constant dense<0xFF800000> : vector<8xf32>
    %6 = vector.multi_reduction <maximumf>, %5, %cst_5 [1] : vector<8x4xf32> to vector<8xf32>
    %7 = vector.shape_cast %6 : vector<8xf32> to vector<8x1xf32>
    %8 = vector.broadcast %7 : vector<8x1xf32> to vector<8x4xf32>
    %9 = arith.subf %5, %8 : vector<8x4xf32>
    %10 = math.exp %9 : vector<8x4xf32>
    %cst_6 = arith.constant dense<0.000000e+00> : vector<8xf32>
    %11 = vector.multi_reduction <add>, %10, %cst_6 [1] : vector<8x4xf32> to vector<8xf32>
    %12 = vector.shape_cast %11 : vector<8xf32> to vector<8x1xf32>
    %cst_7 = arith.constant 1.000000e+00 : f32
    %13 = vector.broadcast %cst_7 : f32 to vector<8x1xf32>
    %14 = arith.divf %13, %12 : vector<8x1xf32>
    %c0_8 = arith.constant 0 : index
    %c0_9 = arith.constant 0 : index
    %15 = vector.load %arg4[%c0_8, %c0_9] : memref<8x1xf32, #tpu.memory_space<vmem>>, vector<8x1xf32>
    tpu.vector_store %arg4[%c0_8, %c0_9], %14 {strides = array<i32>} : memref<8x1xf32, #tpu.memory_space<vmem>>, vector<8x1xf32>,
    %16 = tpu.iota {dimensions = array<i32: 1>} : vector<8x4xi32>
    %17 = vector.broadcast %7 : vector<8x1xf32> to vector<8x4xf32>
    %18 = arith.cmpf oeq, %5, %17 : vector<8x4xf32>
    %c4_i32 = arith.constant 4 : i32
    %19 = vector.broadcast %c4_i32 : i32 to vector<8x4xi32>
    %20 = arith.select %18, %16, %19 : vector<8x4xi1>, vector<8x4xi32>
    %cst_10 = arith.constant dense<2147483647> : vector<8xi32>
    %21 = vector.multi_reduction <minsi>, %20, %cst_10 [1] : vector<8x4xi32> to vector<8xi32>
    %22 = vector.shape_cast %21 : vector<8xi32> to vector<8x1xi32>
    %c0_11 = arith.constant 0 : index
    %c0_12 = arith.constant 0 : index
    %23 = vector.load %arg5[%c0_11, %c0_12] : memref<8x1xi32, #tpu.memory_space<vmem>>, vector<8x1xi32>
    tpu.vector_store %arg5[%c0_11, %c0_12], %22 {strides = array<i32>} : memref<8x1xi32, #tpu.memory_space<vmem>>, vector<8x1xi32>,
    return
  }
  func.func @transform_0(%arg0: i32) -> (i32, i32) {
    %c0_i32 = arith.constant 0 : i32
    %c0_i32_0 = arith.constant 0 : i32
    return %arg0, %c0_i32 : i32, i32
  }
  func.func @transform_1(%arg0: i32) -> (i32, i32) {
    %c0_i32 = arith.constant 0 : i32
    %c0_i32_0 = arith.constant 0 : i32
    %c0_i32_1 = arith.constant 0 : i32
    return %c0_i32, %c0_i32_0 : i32, i32
  }
  func.func @transform_2(%arg0: i32) -> (i32, i32) {
    %c0_i32 = arith.constant 0 : i32
    %c0_i32_0 = arith.constant 0 : i32
    %c0_i32_1 = arith.constant 0 : i32
    return %c0_i32, %c0_i32_0 : i32, i32
  }
  func.func @transform_3(%arg0: i32) -> (i32, i32) {
    %c0_i32 = arith.constant 0 : i32
    %c0_i32_0 = arith.constant 0 : i32
    return %arg0, %c0_i32 : i32, i32
  }
  func.func @transform_4(%arg0: i32) -> (i32, i32) {
    %c0_i32 = arith.constant 0 : i32
    %c0_i32_0 = arith.constant 0 : i32
    return %arg0, %c0_i32 : i32, i32
  }
}

</mosaic_0001>

<llo_original>
// kernel: tpu_custom_call.1
$region0: #{tpu_custom_call.1}
  #allocation0 [shape = 'u32[]', space=smem, size = 0x4, offset = 0x4, fixed_abs, tag = 'smem constant byte address 0x4 - core index']
  #allocation1 [shape = 'u32[144,128]{1,0:T(1,128)}', space=vmem, size = 0x12000, scoped, tag = 'internal scratch']
  %s0 = inlined_call_operand.vmem [shape: f32[16,32], index: 0, kind: input, shape index: {}]
  %s1 = inlined_call_operand.vmem [shape: f32[32,4], index: 1, kind: input, shape index: {}]
  %s2 = inlined_call_operand.vmem [shape: f32[1,4], index: 2, kind: input, shape index: {}]
  %s3 = inlined_call_operand.vmem [shape: f32[16,1], index: 3, kind: output, shape index: {0}]
  %s4 = inlined_call_operand.vmem [shape: s32[16,1], index: 4, kind: output, shape index: {1}]
  %5 = xla_tuple %s3, %s4
  %s6 = sld [smem:[#allocation0]]
  $region53: #{tpu_custom_call.1} parent=0
    _
  %s8 = ssub.s32 1, %s6
  %s9 = scalar_select 0, %s8, %s6
  loop: start=0, step=1, limit=4
  $region2: #{tpu_custom_call.1} parent=0 // loop_pre_header
    _
  $region3: #{tpu_custom_call.1} parent=0 // loop_header
    %s11 = sphi 0, %s15
    %p12 = scmp.ge.s32.totalorder %s11, 4
    %s21 = sphi 0, %s23
    %s24 = sphi 0, %s21
    %s25 = sphi 0, %s24
    %s41 = sphi 0, %s25
    %s45 = sphi 0, %s45
    %s47 = sphi 0, %s45
    %s48 = sphi 0, %s47
    %s62 = sphi 0, %s48
    %s66 = sphi 0, %s66
    %s68 = sphi 0, %s66
    %s69 = sphi 0, %s68
    %s83 = sphi 0, %s69
    %s89 = sphi 0, %s91
    %s92 = sphi 0, %s89
    %s93 = sphi 0, %s92
    %s109 = sphi 0, %s93
    %s115 = sphi 0, %s117
    %s118 = sphi 0, %s115
    %s119 = sphi 0, %s118
    %s135 = sphi 0, %s119
  $region4: #{tpu_custom_call.1} parent=0 // loop_header_branch
    %14 = sbr.rel (%p12) target = $region8
  $region5: #{tpu_custom_call.1} parent=0 // loop_body
    %s16 = ssub.s32 %s11, 1
    %s17 = ssub.s32 %s11, 2
    %s18 = sadd.s32 %s11, 1
    %s19 = ssub.s32 %s11, %s18
    %p20 = scmp.eq.s32.totalorder %s19, 0
    %s22 = sadd.s32 %s21, 1
    %s23 = scalar_select %p20, %s21, %s22
    %p26 = pneg %p20
    %p27 = scmp.eq.s32.totalorder %s11, 1
    %p28 = por %p26, %p27
    %p29 = scmp.ne.s32.totalorder %s21, %s24
    %p30 = scmp.eq.s32.totalorder %s11, 0
    %p31 = por %p29, %p30
    %p32 = scmp.ne.s32.totalorder %s21, %s24
    %p33 = scmp.eq.s32.totalorder %s16, 1
    %p34 = por %p32, %p33
    %p35 = scmp.ne.s32.totalorder %s24, %s25
    %p36 = scmp.eq.s32.totalorder %s16, 0
    %p37 = por %p35, %p36
    %p38 = scmp.ne.s32.totalorder %s24, %s25
    %p39 = scmp.eq.s32.totalorder %s17, 1
    %p40 = por %p38, %p39
    %p42 = scmp.ne.s32.totalorder %s25, %s41
    %p43 = scmp.eq.s32.totalorder %s17, 0
    %p44 = por %p42, %p43
    %s46 = sadd.s32 %s45, 1
    %p49 = scmp.eq.s32.totalorder %s11, 1
    %p50 = scmp.ne.s32.totalorder %s45, %s47
    %p51 = scmp.eq.s32.totalorder %s11, 0
    %p52 = por %p50, %p51
    %p53 = scmp.ne.s32.totalorder %s45, %s47
    %p54 = scmp.eq.s32.totalorder %s16, 1
    %p55 = por %p53, %p54
    %p56 = scmp.ne.s32.totalorder %s47, %s48
    %p57 = scmp.eq.s32.totalorder %s16, 0
    %p58 = por %p56, %p57
    %p59 = scmp.ne.s32.totalorder %s47, %s48
    %p60 = scmp.eq.s32.totalorder %s17, 1
    %p61 = por %p59, %p60
    %p63 = scmp.ne.s32.totalorder %s48, %s62
    %p64 = scmp.eq.s32.totalorder %s17, 0
    %p65 = por %p63, %p64
    %s67 = sadd.s32 %s66, 1
    %p70 = scmp.eq.s32.totalorder %s11, 1
    %p71 = scmp.ne.s32.totalorder %s66, %s68
    %p72 = scmp.eq.s32.totalorder %s11, 0
    %p73 = por %p71, %p72
    %p74 = scmp.ne.s32.totalorder %s66, %s68
    %p75 = scmp.eq.s32.totalorder %s16, 1
    %p76 = por %p74, %p75
    %p77 = scmp.ne.s32.totalorder %s68, %s69
    %p78 = scmp.eq.s32.totalorder %s16, 0
    %p79 = por %p77, %p78
    %p80 = scmp.ne.s32.totalorder %s68, %s69
    %p81 = scmp.eq.s32.totalorder %s17, 1
    %p82 = por %p80, %p81
    %p84 = scmp.ne.s32.totalorder %s69, %s83
    %p85 = scmp.eq.s32.totalorder %s17, 0
    %p86 = por %p84, %p85
    %s87 = ssub.s32 %s11, %s18
    %p88 = scmp.eq.s32.totalorder %s87, 0
    %s90 = sadd.s32 %s89, 1
    %s91 = scalar_select %p88, %s89, %s90
    %p94 = pneg %p88
    %p95 = scmp.eq.s32.totalorder %s11, 1
    %p96 = por %p94, %p95
    %p97 = scmp.ne.s32.totalorder %s89, %s92
    %p98 = scmp.eq.s32.totalorder %s11, 0
    %p99 = por %p97, %p98
    %p100 = scmp.ne.s32.totalorder %s89, %s92
    %p101 = scmp.eq.s32.totalorder %s16, 1
    %p102 = por %p100, %p101
    %p103 = scmp.ne.s32.totalorder %s92, %s93
    %p104 = scmp.eq.s32.totalorder %s16, 0
    %p105 = por %p103, %p104
    %p106 = scmp.ne.s32.totalorder %s92, %s93
    %p107 = scmp.eq.s32.totalorder %s17, 1
    %p108 = por %p106, %p107
    %p110 = scmp.ne.s32.totalorder %s93, %s109
    %p111 = scmp.eq.s32.totalorder %s17, 0
    %p112 = por %p110, %p111
    %s113 = ssub.s32 %s11, %s18
    %p114 = scmp.eq.s32.totalorder %s113, 0
    %s116 = sadd.s32 %s115, 1
    %s117 = scalar_select %p114, %s115, %s116
    %p120 = pneg %p114
    %p121 = scmp.eq.s32.totalorder %s11, 1
    %p122 = por %p120, %p121
    %p123 = scmp.ne.s32.totalorder %s115, %s118
    %p124 = scmp.eq.s32.totalorder %s11, 0
    %p125 = por %p123, %p124
    %p126 = scmp.ne.s32.totalorder %s115, %s118
    %p127 = scmp.eq.s32.totalorder %s16, 1
    %p128 = por %p126, %p127
    %p129 = scmp.ne.s32.totalorder %s118, %s119
    %p130 = scmp.eq.s32.totalorder %s16, 0
    %p131 = por %p129, %p130
    %p132 = scmp.ne.s32.totalorder %s118, %s119
    %p133 = scmp.eq.s32.totalorder %s17, 1
    %p134 = por %p132, %p133
    %p136 = scmp.ne.s32.totalorder %s119, %s135
    %p137 = scmp.eq.s32.totalorder %s17, 0
    %p138 = por %p136, %p137
    %p139 = scmp.le.s32.totalorder 1, %s11
    %p140 = scmp.lt.s32.totalorder %s11, 3
    %p141 = pnand %p139, %p140
    %p142 = pneg %p141
    // Predicated region
    $region9: #{tpu_custom_call.1} parent=5 // pred_check
      _
    $region10: #{tpu_custom_call.1} parent=5 // pred_check_branch
      %144 = sbr.rel (%p141) target = $region12
    $region11: #{tpu_custom_call.1} parent=5 // pred_region
      %s145 = ssub.s32 %s11, 1
      // Predicated region
      $region13: #{tpu_custom_call.1} parent=11 // pred_check
        %p146 = pneg %p58
      $region14: #{tpu_custom_call.1} parent=11 // pred_check_branch
        %148 = sbr.rel (%p146) target = $region16
      $region15: #{tpu_custom_call.1} parent=11 // pred_region
        _
      $region16: #{tpu_custom_call.1} parent=11 // pred_fallthru
        _
      // Predicated region
      $region17: #{tpu_custom_call.1} parent=11 // pred_check
        %p149 = pneg %p79
      $region18: #{tpu_custom_call.1} parent=11 // pred_check_branch
        %151 = sbr.rel (%p149) target = $region20
      $region19: #{tpu_custom_call.1} parent=11 // pred_region
        _
      $region20: #{tpu_custom_call.1} parent=11 // pred_fallthru
        _
    $region12: #{tpu_custom_call.1} parent=5 // pred_fallthru
      _
    %p152 = scmp.lt.s32.totalorder %s11, 2
    // Predicated region
    $region21: #{tpu_custom_call.1} parent=5 // pred_check
      %p153 = pneg %p152
    $region22: #{tpu_custom_call.1} parent=5 // pred_check_branch
      %155 = sbr.rel (%p153) target = $region24
    $region23: #{tpu_custom_call.1} parent=5 // pred_region
      // Predicated region
      $region25: #{tpu_custom_call.1} parent=23 // pred_check
        %p156 = pneg %p31
      $region26: #{tpu_custom_call.1} parent=23 // pred_check_branch
        %158 = sbr.rel (%p156) target = $region28
      $region27: #{tpu_custom_call.1} parent=23 // pred_region
        %p159 = scmp.lt.s32.totalorder %s11, 1
        %s160 = scalar_select %p159, %s11, 1
        %s161 = smul.addr %s160, 8
        %s162 = scalar_lea.vmem %s0, %s161
      $region28: #{tpu_custom_call.1} parent=23 // pred_fallthru
        _
    $region24: #{tpu_custom_call.1} parent=5 // pred_fallthru
      _
    %p163 = scmp.le.s32.totalorder 1, %s11
    %p164 = scmp.lt.s32.totalorder %s11, 3
    %p165 = pnand %p163, %p164
    %p166 = pneg %p165
    // Predicated region
    $region29: #{tpu_custom_call.1} parent=5 // pred_check
      _
    $region30: #{tpu_custom_call.1} parent=5 // pred_check_branch
      %168 = sbr.rel (%p165) target = $region32
    $region31: #{tpu_custom_call.1} parent=5 // pred_region
      %s169 = ssub.s32 %s11, 1
      %p170 = scmp.lt.s32.totalorder %s16, 1
      %s171 = scalar_select %p170, %s16, 1
      %s172 = smul.addr %s171, 8
      %s173 = scalar_lea.vmem %s0, %s172
      %p174 = pneg %p37
      %p175 = pneg %p34
      %p176 = pneg %p58
      %p177 = pneg %p55
      %p178 = pneg %p79
      %p179 = pneg %p76
      %p180 = pneg %p105
      %p181 = pneg %p102
      %p182 = scmp.lt.s32.totalorder %s16, 1
      %s183 = scalar_select %p182, %s16, 1
      %s184 = smul.addr %s183, 8
      %s185 = scalar_lea.vmem %s3, %s184
      %p186 = pneg %p131
      %p187 = pneg %p128
      %p188 = scmp.lt.s32.totalorder %s16, 1
      %s189 = scalar_select %p188, %s16, 1
      %s190 = smul.addr %s189, 8
      %s191 = scalar_lea.vmem %s4, %s190
      %p192 = scmp.lt.s32.totalorder %s16, 1
      %s193 = scalar_select %p192, %s16, 1
      %s194 = smul.addr %s193, 8
      %s195 = scalar_lea.vmem %s0, %s194
      %p196 = scmp.lt.s32.totalorder %s16, 1
      %s197 = scalar_select %p196, %s16, 1
      %s198 = smul.addr %s197, 8
      %s199 = scalar_lea.vmem %s3, %s198
      %p200 = scmp.lt.s32.totalorder %s16, 1
      %s201 = scalar_select %p200, %s16, 1
      %s202 = smul.addr %s201, 8
      %s203 = scalar_lea.vmem %s4, %s202
      %v204 = vld [vmem:[%s195] sm:$0xff]
      %v205 = vld [vmem:[%s1] sm:$0xff]
      %v206 = vld [vmem:[%s1 + $0x8] sm:$0xff]
      %v207 = vld [vmem:[%s1 + $0x10] sm:$0xff]
      %v208 = vld [vmem:[%s1 + $0x18] sm:$0xff]
      %v209 = vld [vmem:[%s2] sm:$0x1]
      %v211 = vlaneseq
      %v212 = vshrl.u32 %v211, 7
      %v213 = vsub.s32 0, %v212
      %v214 = vrot.slane %v209, %v213
      %vm216 = vcmask 261120
      %v218 = vsel %vm216, %v204, 0
      %220 = vmatprep.subr.mxu0 0.0
      %221 = vmatpush1.msra.mxu0 %v205
      %222 = vmatprep.subr.mxu0 0.0
      %223 = vmatpush1.msra.mxu0 %v206
      %224 = vmatprep.subr.mxu0 0.0
      %225 = vmatpush1.msra.mxu0 %v207
      %226 = vmatprep.subr.mxu0 0.0
      %227 = vmatpush1.msra.mxu0 %v208
      %228 = vmatprep.subr.mxu0 0.0
      %229 = vmatpush1.msra.mxu0 0.0
      %230 = vmatprep.subr.mxu0 0.0
      %231 = vmatpush1.msra.mxu0 0.0
      %232 = vmatprep.subr.mxu0 0.0
      %233 = vmatpush1.msra.mxu0 0.0
      %234 = vmatprep.subr.mxu0 0.0
      %235 = vmatpush1.msra.mxu0 0.0
      %236 = vmatprep.subr.mxu0 0.0
      %237 = vmatpush1.msra.mxu0 0.0
      %238 = vmatprep.subr.mxu0 0.0
      %239 = vmatpush1.msra.mxu0 0.0
      %240 = vmatprep.subr.mxu0 0.0
      %241 = vmatpush1.msra.mxu0 0.0
      %242 = vmatprep.subr.mxu0 0.0
      %243 = vmatpush1.msra.mxu0 0.0
      %244 = vmatprep.subr.mxu0 0.0
      %245 = vmatpush1.msra.mxu0 0.0
      %246 = vmatprep.subr.mxu0 0.0
      %247 = vmatpush1.msra.mxu0 0.0
      %248 = vmatprep.subr.mxu0 0.0
      %249 = vmatpush1.msra.mxu0 0.0
      %250 = vmatprep.subr.mxu0 0.0
      %251 = vmatpush1.msra.mxu0 0.0
      %252 = vmatprep.subr.mxu0 0.0
      %253 = vmatpush1.msra.mxu0 0.0
      %254 = vmatprep.subr.mxu0 0.0
      %255 = vmatpush1.msra.mxu0 0.0
      %256 = vmatprep.subr.mxu0 0.0
      %257 = vmatpush1.msra.mxu0 0.0
      %258 = vmatprep.subr.mxu0 0.0
      %259 = vmatpush1.msra.mxu0 0.0
      %260 = vmatprep.subr.mxu0 0.0
      %261 = vmatpush1.msra.mxu0 0.0
      %262 = vmatprep.subr.mxu0 0.0
      %263 = vmatpush1.msra.mxu0 0.0
      %264 = vmatprep.subr.mxu0 0.0
      %265 = vmatpush1.msra.mxu0 0.0
      %266 = vmatprep.subr.mxu0 0.0
      %267 = vmatpush1.msra.mxu0 0.0
      %268 = vmatprep.subr.mxu0 0.0
      %269 = vmatpush1.msra.mxu0 0.0
      %270 = vmatprep.subr.mxu0 0.0
      %271 = vmatpush1.msra.mxu0 0.0
      %272 = vmatprep.subr.mxu0 0.0
      %273 = vmatpush1.msra.mxu0 0.0
      %274 = vmatprep.subr.mxu0 0.0
      %275 = vmatpush1.msra.mxu0 0.0
      %276 = vmatprep.subr.mxu0 0.0
      %277 = vmatpush1.msra.mxu0 0.0
      %278 = vmatprep.subr.mxu0 0.0
      %279 = vmatpush1.msra.mxu0 0.0
      %280 = vmatprep.subr.mxu0 0.0
      %281 = vmatpush1.msra.mxu0 0.0
      %282 = vmatprep.subr.mxu0 0.0
      %283 = vmatpush1.msra.mxu0 0.0
      %284 = vmatprep.mubr.f32.mxu0 0.0
      %285 = vmatmul.mubr.f32.gmra.mrb[0].mxu0 %v218
      %v286 = vpop.f32.mrb[0].mxu0
      %v287 = vadd.f32 %v214, %v286
      %v288 = vpop.f32.mrb[0].mxu0
      %289 = vdwg.mxu0
      %vm290 = vcmask 31744
      %v291 = vsel %vm290, %v287, -inf
      %292 = vmax.xlane.f32.xlu0 %v291
      %v293 = vpop.xlane.xlu0 %292
      %v294 = vsub.f32 %v287, %v293
      %v295 = vmul.f32 %v294, 1.442695
      %v296 = vpow.pop %v295
      %v297 = vsel %vm290, %v296, 0.0
      %298 = vadd.xlane.f32.xlu0 %v297
      %v299 = vpop.xlane.xlu0 %298
      %v300 = vrcp.pop %v299
      %v301 = vmul.f32 1.0, %v300
      %vm302 = vcmask 7168
      %303 = vst.msk [vmem:[%s199] sm:$0xff] %vm302, %v301
      %v304 = vlaneseq
      %v305 = vand.u32 %v304, 127
      %vm306 = vcmp.eq.f32.partialorder %v287, %v293
      %v307 = vsel %vm306, %v305, 4
      %v308 = vsel %vm290, %v307, 2147483647
      %v309 = vand.u32 %v308, 65535
      %v310 = vshra.s32 %v308, 16
      %v311 = vcvt.s32.f32 %v309
      %v312 = vcvt.s32.f32 %v310
      %313 = vmin.xlane.f32.xlu0 %v312
      %v314 = vpop.xlane.xlu0 %313
      %vm315 = vcmp.eq.f32.partialorder %v312, %v314
      %v316 = vsel %vm315, %v311, inf
      %317 = vmin.xlane.f32.xlu0 %v316
      %v318 = vpop.xlane.xlu0 %317
      %v319 = vcvt.f32.s32 %v318
      %v320 = vcvt.f32.s32 %v314
      %v321 = vshll.u32 %v320, 16
      %v322 = vadd.s32 %v321, %v319
      %323 = vst.msk [vmem:[%s203] sm:$0xff] %vm302, %v322
      %p324 = scmp.lt.s32.totalorder %s16, 1
      %s325 = scalar_select %p324, %s16, 1
      %s326 = smul.addr %s325, 8
      %s327 = scalar_lea.vmem %s3, %s326
      %p328 = scmp.lt.s32.totalorder %s16, 1
      %s329 = scalar_select %p328, %s16, 1
      %s330 = smul.addr %s329, 8
      %s331 = scalar_lea.vmem %s4, %s330
      // Predicated region
      $region33: #{tpu_custom_call.1} parent=31 // pred_check
        %p332 = pneg %p102
      $region34: #{tpu_custom_call.1} parent=31 // pred_check_branch
        %334 = sbr.rel (%p332) target = $region36
      $region35: #{tpu_custom_call.1} parent=31 // pred_region
        _
      $region36: #{tpu_custom_call.1} parent=31 // pred_fallthru
        _
      // Predicated region
      $region37: #{tpu_custom_call.1} parent=31 // pred_check
        %p335 = pneg %p128
      $region38: #{tpu_custom_call.1} parent=31 // pred_check_branch
        %337 = sbr.rel (%p335) target = $region40
      $region39: #{tpu_custom_call.1} parent=31 // pred_region
        _
      $region40: #{tpu_custom_call.1} parent=31 // pred_fallthru
        _
    $region32: #{tpu_custom_call.1} parent=5 // pred_fallthru
      _
    %p338 = scmp.le.s32.totalorder 2, %s11
    // Predicated region
    $region41: #{tpu_custom_call.1} parent=5 // pred_check
      %p339 = pneg %p338
    $region42: #{tpu_custom_call.1} parent=5 // pred_check_branch
      %341 = sbr.rel (%p339) target = $region44
    $region43: #{tpu_custom_call.1} parent=5 // pred_region
      %s342 = ssub.s32 %s11, 2
      // Predicated region
      $region45: #{tpu_custom_call.1} parent=43 // pred_check
        %p343 = pneg %p108
      $region46: #{tpu_custom_call.1} parent=43 // pred_check_branch
        %345 = sbr.rel (%p343) target = $region48
      $region47: #{tpu_custom_call.1} parent=43 // pred_region
        %p346 = scmp.lt.s32.totalorder %s17, 1
        %s347 = scalar_select %p346, %s17, 1
        %s348 = smul.addr %s347, 8
        %s349 = scalar_lea.vmem %s3, %s348
      $region48: #{tpu_custom_call.1} parent=43 // pred_fallthru
        _
      // Predicated region
      $region49: #{tpu_custom_call.1} parent=43 // pred_check
        %p350 = pneg %p134
      $region50: #{tpu_custom_call.1} parent=43 // pred_check_branch
        %352 = sbr.rel (%p350) target = $region52
      $region51: #{tpu_custom_call.1} parent=43 // pred_region
        %p353 = scmp.lt.s32.totalorder %s17, 1
        %s354 = scalar_select %p353, %s17, 1
        %s355 = smul.addr %s354, 8
        %s356 = scalar_lea.vmem %s4, %s355
      $region52: #{tpu_custom_call.1} parent=43 // pred_fallthru
        _
    $region44: #{tpu_custom_call.1} parent=5 // pred_fallthru
      _
  $region6: #{tpu_custom_call.1} parent=0 // loop_footer
    %s15 = sadd.s32 1, %s11
  $region7: #{tpu_custom_call.1} parent=0 // loop_footer_branch
    %10 = sbr.rel target = $region3
  $region8: #{tpu_custom_call.1} parent=0 // loop_exit
    _

</llo_original>
